<compile_context>
chip_gen: v7x
topology: tpu7x:2x2x1
jax: 0.10.0
libtpu: 0.0.40
codegen_flags: <defaults>
</compile_context>

<pallas_src>
import functools

import jax
import jax.numpy as jnp
from jax import lax
from jax.experimental import pallas as pl
from jax.experimental.pallas import tpu as pltpu


def channel_fc_kernel(x_ref, w_ref, b_ref, o_ref, *, rhs_contract_dim):
    # x_ref: (TF, B, N)          activations for TF features (compute dtype)
    # w_ref: (TF, N, N)          per-feature weights
    #                            rhs_contract_dim=2 -> PyTorch (out, in) layout (x @ W^T)
    #                            rhs_contract_dim=1 -> pre-transposed (in, out) layout
    # b_ref: (TF, 1, N)          per-feature bias (f32)
    # o_ref: (TF, B, N)          output
    x = x_ref[...]
    w = w_ref[...]
    y = lax.dot_general(
        x, w,
        dimension_numbers=(((2,), (rhs_contract_dim,)), ((0,), (0,))),
        preferred_element_type=jnp.float32,
    )
    o_ref[...] = (y + b_ref[...]).astype(o_ref.dtype)


def _device_params():
    """Best-effort (per-core VMEM bytes, TensorCores per chip) for device 0."""
    vmem_bytes = 128 * 1024 * 1024   # v5e / v6e
    num_tc = 1                       # v5e / v6e are single-TC
    try:
        kind = jax.devices()[0].device_kind.lower()
    except Exception:
        kind = ""
    if "v7" in kind:
        vmem_bytes, num_tc = 64 * 1024 * 1024, 2    # 64 MiB per TC, 2 TCs / chip
    elif "v4" in kind or "v5p" in kind or kind.strip().endswith("v5"):
        num_tc = 2                                  # megacore chips
    try:  # refine VMEM size if the query is available on this jax version
        info = pltpu.get_tpu_info()
        vmem_bytes = int(getattr(info, "vmem_capacity_bytes", vmem_bytes)) or vmem_bytes
    except Exception:
        pass
    return vmem_bytes, num_tc


def _pick_tf(F, B, N, *, x_itemsize, w_itemsize, out_itemsize, budget_bytes, num_tc):
    """Pick features-per-step (tf) and the (possibly padded) feature count."""
    per_feature = (
        2 * N * N * w_itemsize        # double-buffered weight block (dominant)
        + 2 * B * N * x_itemsize      # double-buffered activation block
        + 2 * B * N * out_itemsize    # double-buffered output block
        + 2 * N * 4                   # double-buffered f32 bias row
        + B * N * 4                   # f32 dot_general intermediate (single-buffered)
    )
    tf_fit = max(1, int(budget_bytes) // max(per_feature, 1))
    if tf_fit >= F:
        return F, F                   # whole problem resident -> one grid step
    if num_tc >= 2 and F >= 2:
        # Keep >= 2 grid steps so both TensorCores (v7x) get work.
        tf_fit = min(tf_fit, max(1, pl.cdiv(F, 2)))
    # Prefer a divisor of F close to the VMEM-optimal tf (no padding).
    tf = tf_fit
    while F % tf:
        tf -= 1
    if tf * 2 >= tf_fit:
        return tf, F
    # Divisor is too small (e.g. prime F): pad F up to a multiple of optimal tf.
    tf = tf_fit
    return tf, pl.cdiv(F, tf) * tf


def channel_fc(x, weights, biases, *, compute_dtype=None, tf=None,
               vmem_budget_bytes=None, weights_pretransposed=False):
    """ChannelFC forward.

    x:        (B, F, H, W)
    weights:  (F, N, N) with N = H*W.  Default PyTorch (out, in) layout; if
              weights_pretransposed=True, expects (in, out) layout per feature.
    biases:   (F, N)
    compute_dtype: None -> use x.dtype (exact PyTorch f32 semantics).
                   jnp.bfloat16 -> opt-in fast path (halves streamed bytes),
                   always with f32 MXU accumulation + f32 bias add.
    """
    B, F, H, W = x.shape
    N = H * W
    assert weights.shape == (F, N, N) and biases.shape == (F, N)

    if compute_dtype is None:
        compute_dtype = x.dtype       # exact semantics by default; bf16 is opt-in
    compute_dtype = jnp.dtype(compute_dtype)
    out_dtype = x.dtype

    vmem_bytes, num_tc = _device_params()
    if vmem_budget_bytes is None:
        # ~44 MiB usable on v7x (64 MiB/TC), ~90 MiB on v5e/v6e (128 MiB).
        vmem_budget_bytes = (vmem_bytes * 7) // 10
    vmem_limit = int(min(vmem_bytes, vmem_budget_bytes + (16 << 20)))

    if tf is None:
        tf, F_pad = _pick_tf(
            F, B, N,
            x_itemsize=compute_dtype.itemsize,
            w_itemsize=compute_dtype.itemsize,
            out_itemsize=jnp.dtype(out_dtype).itemsize,
            budget_bytes=vmem_budget_bytes,
            num_tc=num_tc)
    else:
        F_pad = pl.cdiv(F, tf) * tf
    grid_f = F_pad // tf

    # (F, B, N) internal layout: N (the large dim) sits on the lane axis for
    # lane-dense stores; B equals the full second-minor dim so the (8,128)
    # block rule is satisfied for any B.  Activation relayout traffic is tiny
    # next to the weight stream.
    x_fbn = jnp.transpose(x.reshape(B, F, N), (1, 0, 2)).astype(compute_dtype)
    w = weights.astype(compute_dtype)            # no HBM-level transpose by default
    b = biases.reshape(F, 1, N).astype(jnp.float32)

    if F_pad != F:
        pad = F_pad - F
        x_fbn = jnp.pad(x_fbn, ((0, pad), (0, 0), (0, 0)))
        w = jnp.pad(w, ((0, pad), (0, 0), (0, 0)))
        b = jnp.pad(b, ((0, pad), (0, 0), (0, 0)))

    rhs_contract_dim = 1 if weights_pretransposed else 2
    kernel = functools.partial(channel_fc_kernel, rhs_contract_dim=rhs_contract_dim)

    cost = pl.CostEstimate(
        flops=2 * B * N * N * F_pad,
        transcendentals=0,
        bytes_accessed=(w.size * w.dtype.itemsize
                        + x_fbn.size * x_fbn.dtype.itemsize
                        + F_pad * B * N * jnp.dtype(out_dtype).itemsize
                        + b.size * b.dtype.itemsize),
    )

    out = pl.pallas_call(
        kernel,
        out_shape=jax.ShapeDtypeStruct((F_pad, B, N), out_dtype),
        grid=(grid_f,),
        in_specs=[
            pl.BlockSpec((tf, B, N), lambda i: (i, 0, 0)),
            pl.BlockSpec((tf, N, N), lambda i: (i, 0, 0)),
            pl.BlockSpec((tf, 1, N), lambda i: (i, 0, 0)),
        ],
        out_specs=pl.BlockSpec((tf, B, N), lambda i: (i, 0, 0)),
        compiler_params=pltpu.CompilerParams(
            dimension_semantics=("parallel",),
            vmem_limit_bytes=vmem_limit),
        cost_estimate=cost,
    )(x_fbn, w, b)

    out = out[:F]                                  # drop feature padding, if any
    return jnp.transpose(out, (1, 0, 2)).reshape(B, F, H, W)


def channel_fc_ref(x, weights, biases):
    """Pure-JAX reference mirroring the PyTorch forward exactly (f32)."""
    B, F, H, W = x.shape
    N = H * W
    x_flat = x.reshape(B, F, N)
    y = jnp.einsum('bfn,fmn->bfm', x_flat, weights) + biases[None, :, :]
    return y.reshape(B, F, H, W)


if __name__ == "__main__":
    # Shapes implied by the module: C == numFeatures, num_channels == H*W.
    batch, num_features, height, width = 2, 4, 16, 16
    num_channels = height * width  # 256

    key = jax.random.PRNGKey(0)
    kx, kw, kb = jax.random.split(key, 3)

    x = jax.random.normal(kx, (batch, num_features, height, width), jnp.float32)
    bound = 1.0 / (num_channels ** 0.5)
    weights = jax.random.uniform(
        kw, (num_features, num_channels, num_channels), jnp.float32,
        minval=-bound, maxval=bound)
    biases = jax.random.uniform(
        kb, (num_features, num_channels), jnp.float32,
        minval=-bound, maxval=bound)

    ref = channel_fc_ref(x, weights, biases)

    # Default path: exact f32 PyTorch semantics (whole problem -> one grid step).
    out = jax.block_until_ready(channel_fc(x, weights, biases))
    assert out.shape == (batch, num_features, height, width)
    assert jnp.allclose(out, ref, atol=1e-4, rtol=1e-4), "f32 path mismatch"

    # Opt-in bf16 streaming fast path (kernel is weight-bandwidth-bound).
    out_bf16 = jax.block_until_ready(
        channel_fc(x, weights, biases, compute_dtype=jnp.bfloat16))
    ref_q = channel_fc_ref(
        x.astype(jnp.bfloat16).astype(jnp.float32),
        weights.astype(jnp.bfloat16).astype(jnp.float32), biases)
    assert jnp.allclose(out_bf16, ref_q, atol=1e-3, rtol=1e-3), "bf16 path mismatch"
    assert jnp.allclose(out_bf16, ref, atol=5e-2, rtol=5e-2), "bf16 vs f32 drift"

    # Pre-transposed weight layout path (parameter stores that keep (in, out)).
    out_pt = jax.block_until_ready(
        channel_fc(x, jnp.swapaxes(weights, 1, 2), biases,
                   weights_pretransposed=True))
    assert jnp.allclose(out_pt, ref, atol=1e-4, rtol=1e-4), "pretransposed mismatch"

    # Non-divisor feature blocking (forces the F-padding path: F=4, tf=3).
    out_pad = jax.block_until_ready(channel_fc(x, weights, biases, tf=3))
    assert jnp.allclose(out_pad, ref, atol=1e-4, rtol=1e-4), "padded-F mismatch"

    print("KERNEL_OK")
</pallas_src>

<mosaic_0001>
module attributes {stable_mosaic.version = 11 : i64} {
  func.func @channel_fc_kernel(%arg0: i32, %arg1: memref<4x2x256xf32, #tpu.memory_space<vmem>>, %arg2: memref<4x256x256xf32, #tpu.memory_space<vmem>>, %arg3: memref<4x1x256xf32, #tpu.memory_space<vmem>>, %arg4: memref<4x2x256xf32, #tpu.memory_space<vmem>>) attributes {dimension_semantics = [#tpu.dimension_semantics<parallel>], iteration_bounds = array<i64: 1>, scalar_prefetch = 0 : i64, scratch_operands = 0 : i64, tpu.core_type = #tpu.core_type<tc>, window_params = [{transform_indices = @transform_0, window_bounds = array<i64: 4, 2, 256>}, {transform_indices = @transform_1, window_bounds = array<i64: 4, 256, 256>}, {transform_indices = @transform_2, window_bounds = array<i64: 4, 1, 256>}, {transform_indices = @transform_3, window_bounds = array<i64: 4, 2, 256>}]} {
    %c0 = arith.constant 0 : index
    %c0_0 = arith.constant 0 : index
    %c0_1 = arith.constant 0 : index
    %0 = vector.load %arg1[%c0, %c0_0, %c0_1] : memref<4x2x256xf32, #tpu.memory_space<vmem>>, vector<4x2x256xf32>
    %c0_2 = arith.constant 0 : index
    %c0_3 = arith.constant 0 : index
    %c0_4 = arith.constant 0 : index
    %1 = vector.load %arg2[%c0_2, %c0_3, %c0_4] : memref<4x256x256xf32, #tpu.memory_space<vmem>>, vector<4x256x256xf32>
    %cst = arith.constant dense<0.000000e+00> : vector<4x2x256xf32>
    %2 = tpu.matmul %0, %1, %cst {dimension_numbers = #tpu.dot_dimension_numbers<[2], [2], [1], [1], [0, 0, 0, 1, 1, 1], [0], [0]>} : vector<4x2x256xf32>, vector<4x256x256xf32>, vector<4x2x256xf32> -> vector<4x2x256xf32>
    %c0_5 = arith.constant 0 : index
    %c0_6 = arith.constant 0 : index
    %c0_7 = arith.constant 0 : index
    %3 = vector.load %arg3[%c0_5, %c0_6, %c0_7] : memref<4x1x256xf32, #tpu.memory_space<vmem>>, vector<4x1x256xf32>
    %4 = vector.broadcast %3 : vector<4x1x256xf32> to vector<4x2x256xf32>
    %5 = arith.addf %2, %4 : vector<4x2x256xf32>
    %c0_8 = arith.constant 0 : index
    %c0_9 = arith.constant 0 : index
    %c0_10 = arith.constant 0 : index
    %6 = vector.load %arg4[%c0_8, %c0_9, %c0_10] : memref<4x2x256xf32, #tpu.memory_space<vmem>>, vector<4x2x256xf32>
    tpu.vector_store %arg4[%c0_8, %c0_9, %c0_10], %5 {strides = array<i32>} : memref<4x2x256xf32, #tpu.memory_space<vmem>>, vector<4x2x256xf32>,
    return
  }
  func.func @transform_0(%arg0: i32) -> (i32, i32, i32) {
    %c0_i32 = arith.constant 0 : i32
    %c0_i32_0 = arith.constant 0 : i32
    %c0_i32_1 = arith.constant 0 : i32
    return %arg0, %c0_i32, %c0_i32_0 : i32, i32, i32
  }
  func.func @transform_1(%arg0: i32) -> (i32, i32, i32) {
    %c0_i32 = arith.constant 0 : i32
    %c0_i32_0 = arith.constant 0 : i32
    %c0_i32_1 = arith.constant 0 : i32
    return %arg0, %c0_i32, %c0_i32_0 : i32, i32, i32
  }
  func.func @transform_2(%arg0: i32) -> (i32, i32, i32) {
    %c0_i32 = arith.constant 0 : i32
    %c0_i32_0 = arith.constant 0 : i32
    %c0_i32_1 = arith.constant 0 : i32
    return %arg0, %c0_i32, %c0_i32_0 : i32, i32, i32
  }
  func.func @transform_3(%arg0: i32) -> (i32, i32, i32) {
    %c0_i32 = arith.constant 0 : i32
    %c0_i32_0 = arith.constant 0 : i32
    %c0_i32_1 = arith.constant 0 : i32
    return %arg0, %c0_i32, %c0_i32_0 : i32, i32, i32
  }
}

</mosaic_0001>

<llo_original>
// kernel: tpu_custom_call.1
$region0: #{tpu_custom_call.1}
  #allocation0 [shape = 'u32[]', space=smem, size = 0x4, offset = 0x4, fixed_abs, tag = 'smem constant byte address 0x4 - core index']
  #allocation1 [shape = 'u32[144,128]{1,0:T(1,128)}', space=vmem, size = 0x12000, scoped, tag = 'internal scratch']
  %s0 = inlined_call_operand.hbm [shape: f32[4,2,256], index: 0, kind: input, shape index: {}]
  %s1 = inlined_call_operand.hbm [shape: f32[4,256,256], index: 1, kind: input, shape index: {}]
  %s2 = inlined_call_operand.hbm [shape: f32[4,1,256], index: 2, kind: input, shape index: {}]
  %s3 = inlined_call_operand.hbm [shape: f32[4,2,256], index: 3, kind: output, shape index: {}]
  %s4 = sld [smem:[#allocation0]]
  $region34: #{tpu_custom_call.1} parent=0
    _
  %s6 = ssub.s32 1, %s4
  %s7 = scalar_select 0, %s6, %s4
  $region1: #{tpu_custom_call.1} parent=0
    #allocation2 [shape = 'u8[8192]{0}', space=vmem, size = 0x2000, scoped, tag = 'input window, operand 0, single buffered']
    #allocation3 [shape = 's32[1]{0}', space=sflag, size = 0x4, scoped, tag = 'scoped memory for tpu_custom_call.1']
    #allocation4 [shape = 's32[1]{0}', space=sflag, size = 0x4, scoped, tag = 'scoped memory for tpu_custom_call.1']
    #allocation5 [shape = 'u8[1048576]{0}', space=vmem, size = 0x100000, scoped, tag = 'input window, operand 1, single buffered']
    #allocation6 [shape = 's32[1]{0}', space=sflag, size = 0x4, scoped, tag = 'scoped memory for tpu_custom_call.1']
    #allocation7 [shape = 'u8[4096]{0}', space=vmem, size = 0x1000, scoped, tag = 'input window, operand 2, single buffered']
    #allocation8 [shape = 'u8[8192]{0}', space=vmem, size = 0x2000, scoped, tag = 'output window, operand 0, single buffered']
    %8 = vsyncpa [#allocation3], 0
    %9 = vsyncpa [#allocation6], 0
    %10 = vsyncpa [#allocation4], 0
    // Predicated region
    $region2: #{tpu_custom_call.1} parent=1 // pred_check
      _
    $region3: #{tpu_custom_call.1} parent=1 // pred_check_branch
      %12 = sbr.rel (0) target = $region5
    $region4: #{tpu_custom_call.1} parent=1 // pred_region
      %s14 = ssub.s32 256, 256
      %15 = vsyncadd [#allocation3], %s14
      %s16 = sshll.u32 [#allocation2], 4
      %s17 = int_to_ptr.vmem [resolvable:$true] %s16
      %22 = dma.hbm_to_vmem [thread:$0]  %s0, 256, %s17, [#allocation3], 64, 64, 4
    $region5: #{tpu_custom_call.1} parent=1 // pred_fallthru
      _
    // Predicated region
    $region6: #{tpu_custom_call.1} parent=1 // pred_check
      _
    $region7: #{tpu_custom_call.1} parent=1 // pred_check_branch
      %24 = sbr.rel (0) target = $region9
    $region8: #{tpu_custom_call.1} parent=1 // pred_region
      %s26 = ssub.s32 32768, 32768
      %27 = vsyncadd [#allocation6], %s26
      %s28 = sshll.u32 [#allocation5], 4
      %s29 = int_to_ptr.vmem [resolvable:$true] %s28
      %34 = dma.hbm_to_vmem [thread:$0]  %s1, 32768, %s29, [#allocation6], 256, 256, 16
    $region9: #{tpu_custom_call.1} parent=1 // pred_fallthru
      _
    // Predicated region
    $region10: #{tpu_custom_call.1} parent=1 // pred_check
      _
    $region11: #{tpu_custom_call.1} parent=1 // pred_check_branch
      %36 = sbr.rel (0) target = $region13
    $region12: #{tpu_custom_call.1} parent=1 // pred_region
      %s38 = ssub.s32 128, 128
      %39 = vsyncadd [#allocation6], %s38
      %s40 = sshll.u32 [#allocation7], 4
      %s41 = int_to_ptr.vmem [resolvable:$true] %s40
      %46 = dma.hbm_to_vmem [thread:$0]  %s2, 128, %s41, [#allocation6], 32, 32, 2
    $region13: #{tpu_custom_call.1} parent=1 // pred_fallthru
      _
    // Predicated region
    $region14: #{tpu_custom_call.1} parent=1 // pred_check
      _
    $region15: #{tpu_custom_call.1} parent=1 // pred_check_branch
      %48 = sbr.rel (0) target = $region17
    $region16: #{tpu_custom_call.1} parent=1 // pred_region
      %49 = dma.done [#allocation3], 256
    $region17: #{tpu_custom_call.1} parent=1 // pred_fallthru
      _
    // Predicated region
    $region18: #{tpu_custom_call.1} parent=1 // pred_check
      _
    $region19: #{tpu_custom_call.1} parent=1 // pred_check_branch
      %51 = sbr.rel (0) target = $region21
    $region20: #{tpu_custom_call.1} parent=1 // pred_region
      %52 = dma.done [#allocation6], 32768
    $region21: #{tpu_custom_call.1} parent=1 // pred_fallthru
      _
    // Predicated region
    $region22: #{tpu_custom_call.1} parent=1 // pred_check
      _
    $region23: #{tpu_custom_call.1} parent=1 // pred_check_branch
      %54 = sbr.rel (0) target = $region25
    $region24: #{tpu_custom_call.1} parent=1 // pred_region
      %55 = dma.done [#allocation6], 128
    $region25: #{tpu_custom_call.1} parent=1 // pred_fallthru
      _
    %v56 = vld [vmem:[#allocation2] sm:$0xf]
    %v57 = vld [vmem:[#allocation2 + $0x4] sm:$0xf]
    %v58 = vld [vmem:[#allocation2 + $0x8] sm:$0xf]
    %v59 = vld [vmem:[#allocation2 + $0xc] sm:$0xf]
    %v60 = vld [vmem:[#allocation5] sm:$0xff]
    %v61 = vld [vmem:[#allocation5 + $0x8] sm:$0xff]
    %v62 = vld [vmem:[#allocation5 + $0x10] sm:$0xff]
    %v63 = vld [vmem:[#allocation5 + $0x18] sm:$0xff]
    %v64 = vld [vmem:[#allocation5 + $0x20] sm:$0xff]
    %v65 = vld [vmem:[#allocation5 + $0x28] sm:$0xff]
    %v66 = vld [vmem:[#allocation5 + $0x30] sm:$0xff]
    %v67 = vld [vmem:[#allocation5 + $0x38] sm:$0xff]
    %v68 = vld [vmem:[#allocation5 + $0x40] sm:$0xff]
    %v69 = vld [vmem:[#allocation5 + $0x48] sm:$0xff]
    %v70 = vld [vmem:[#allocation5 + $0x50] sm:$0xff]
    %v71 = vld [vmem:[#allocation5 + $0x58] sm:$0xff]
    %v72 = vld [vmem:[#allocation5 + $0x60] sm:$0xff]
    %v73 = vld [vmem:[#allocation5 + $0x68] sm:$0xff]
    %v74 = vld [vmem:[#allocation5 + $0x70] sm:$0xff]
    %v75 = vld [vmem:[#allocation5 + $0x78] sm:$0xff]
    %v76 = vld [vmem:[#allocation5 + $0x80] sm:$0xff]
    %v77 = vld [vmem:[#allocation5 + $0x88] sm:$0xff]
    %v78 = vld [vmem:[#allocation5 + $0x90] sm:$0xff]
    %v79 = vld [vmem:[#allocation5 + $0x98] sm:$0xff]
    %v80 = vld [vmem:[#allocation5 + $0xa0] sm:$0xff]
    %v81 = vld [vmem:[#allocation5 + $0xa8] sm:$0xff]
    %v82 = vld [vmem:[#allocation5 + $0xb0] sm:$0xff]
    %v83 = vld [vmem:[#allocation5 + $0xb8] sm:$0xff]
    %v84 = vld [vmem:[#allocation5 + $0xc0] sm:$0xff]
    %v85 = vld [vmem:[#allocation5 + $0xc8] sm:$0xff]
    %v86 = vld [vmem:[#allocation5 + $0xd0] sm:$0xff]
    %v87 = vld [vmem:[#allocation5 + $0xd8] sm:$0xff]
    %v88 = vld [vmem:[#allocation5 + $0xe0] sm:$0xff]
    %v89 = vld [vmem:[#allocation5 + $0xe8] sm:$0xff]
    %v90 = vld [vmem:[#allocation5 + $0xf0] sm:$0xff]
    %v91 = vld [vmem:[#allocation5 + $0xf8] sm:$0xff]
    %v92 = vld [vmem:[#allocation5 + $0x100] sm:$0xff]
    %v93 = vld [vmem:[#allocation5 + $0x108] sm:$0xff]
    %v94 = vld [vmem:[#allocation5 + $0x110] sm:$0xff]
    %v95 = vld [vmem:[#allocation5 + $0x118] sm:$0xff]
    %v96 = vld [vmem:[#allocation5 + $0x120] sm:$0xff]
    %v97 = vld [vmem:[#allocation5 + $0x128] sm:$0xff]
    %v98 = vld [vmem:[#allocation5 + $0x130] sm:$0xff]
    %v99 = vld [vmem:[#allocation5 + $0x138] sm:$0xff]
    %v100 = vld [vmem:[#allocation5 + $0x140] sm:$0xff]
    %v101 = vld [vmem:[#allocation5 + $0x148] sm:$0xff]
    %v102 = vld [vmem:[#allocation5 + $0x150] sm:$0xff]
    %v103 = vld [vmem:[#allocation5 + $0x158] sm:$0xff]
    %v104 = vld [vmem:[#allocation5 + $0x160] sm:$0xff]
    %v105 = vld [vmem:[#allocation5 + $0x168] sm:$0xff]
    %v106 = vld [vmem:[#allocation5 + $0x170] sm:$0xff]
    %v107 = vld [vmem:[#allocation5 + $0x178] sm:$0xff]
    %v108 = vld [vmem:[#allocation5 + $0x180] sm:$0xff]
    %v109 = vld [vmem:[#allocation5 + $0x188] sm:$0xff]
    %v110 = vld [vmem:[#allocation5 + $0x190] sm:$0xff]
    %v111 = vld [vmem:[#allocation5 + $0x198] sm:$0xff]
    %v112 = vld [vmem:[#allocation5 + $0x1a0] sm:$0xff]
    %v113 = vld [vmem:[#allocation5 + $0x1a8] sm:$0xff]
    %v114 = vld [vmem:[#allocation5 + $0x1b0] sm:$0xff]
    %v115 = vld [vmem:[#allocation5 + $0x1b8] sm:$0xff]
    %v116 = vld [vmem:[#allocation5 + $0x1c0] sm:$0xff]
    %v117 = vld [vmem:[#allocation5 + $0x1c8] sm:$0xff]
    %v118 = vld [vmem:[#allocation5 + $0x1d0] sm:$0xff]
    %v119 = vld [vmem:[#allocation5 + $0x1d8] sm:$0xff]
    %v120 = vld [vmem:[#allocation5 + $0x1e0] sm:$0xff]
    %v121 = vld [vmem:[#allocation5 + $0x1e8] sm:$0xff]
    %v122 = vld [vmem:[#allocation5 + $0x1f0] sm:$0xff]
    %v123 = vld [vmem:[#allocation5 + $0x1f8] sm:$0xff]
    %v124 = vld [vmem:[#allocation5 + $0x200] sm:$0xff]
    %v125 = vld [vmem:[#allocation5 + $0x208] sm:$0xff]
    %v126 = vld [vmem:[#allocation5 + $0x210] sm:$0xff]
    %v127 = vld [vmem:[#allocation5 + $0x218] sm:$0xff]
    %v128 = vld [vmem:[#allocation5 + $0x220] sm:$0xff]
    %v129 = vld [vmem:[#allocation5 + $0x228] sm:$0xff]
    %v130 = vld [vmem:[#allocation5 + $0x230] sm:$0xff]
    %v131 = vld [vmem:[#allocation5 + $0x238] sm:$0xff]
    %v132 = vld [vmem:[#allocation5 + $0x240] sm:$0xff]
    %v133 = vld [vmem:[#allocation5 + $0x248] sm:$0xff]
    %v134 = vld [vmem:[#allocation5 + $0x250] sm:$0xff]
    %v135 = vld [vmem:[#allocation5 + $0x258] sm:$0xff]
    %v136 = vld [vmem:[#allocation5 + $0x260] sm:$0xff]
    %v137 = vld [vmem:[#allocation5 + $0x268] sm:$0xff]
    %v138 = vld [vmem:[#allocation5 + $0x270] sm:$0xff]
    %v139 = vld [vmem:[#allocation5 + $0x278] sm:$0xff]
    %v140 = vld [vmem:[#allocation5 + $0x280] sm:$0xff]
    %v141 = vld [vmem:[#allocation5 + $0x288] sm:$0xff]
    %v142 = vld [vmem:[#allocation5 + $0x290] sm:$0xff]
    %v143 = vld [vmem:[#allocation5 + $0x298] sm:$0xff]
    %v144 = vld [vmem:[#allocation5 + $0x2a0] sm:$0xff]
    %v145 = vld [vmem:[#allocation5 + $0x2a8] sm:$0xff]
    %v146 = vld [vmem:[#allocation5 + $0x2b0] sm:$0xff]
    %v147 = vld [vmem:[#allocation5 + $0x2b8] sm:$0xff]
    %v148 = vld [vmem:[#allocation5 + $0x2c0] sm:$0xff]
    %v149 = vld [vmem:[#allocation5 + $0x2c8] sm:$0xff]
    %v150 = vld [vmem:[#allocation5 + $0x2d0] sm:$0xff]
    %v151 = vld [vmem:[#allocation5 + $0x2d8] sm:$0xff]
    %v152 = vld [vmem:[#allocation5 + $0x2e0] sm:$0xff]
    %v153 = vld [vmem:[#allocation5 + $0x2e8] sm:$0xff]
    %v154 = vld [vmem:[#allocation5 + $0x2f0] sm:$0xff]
    %v155 = vld [vmem:[#allocation5 + $0x2f8] sm:$0xff]
    %v156 = vld [vmem:[#allocation5 + $0x300] sm:$0xff]
    %v157 = vld [vmem:[#allocation5 + $0x308] sm:$0xff]
    %v158 = vld [vmem:[#allocation5 + $0x310] sm:$0xff]
    %v159 = vld [vmem:[#allocation5 + $0x318] sm:$0xff]
    %v160 = vld [vmem:[#allocation5 + $0x320] sm:$0xff]
    %v161 = vld [vmem:[#allocation5 + $0x328] sm:$0xff]
    %v162 = vld [vmem:[#allocation5 + $0x330] sm:$0xff]
    %v163 = vld [vmem:[#allocation5 + $0x338] sm:$0xff]
    %v164 = vld [vmem:[#allocation5 + $0x340] sm:$0xff]
    %v165 = vld [vmem:[#allocation5 + $0x348] sm:$0xff]
    %v166 = vld [vmem:[#allocation5 + $0x350] sm:$0xff]
    %v167 = vld [vmem:[#allocation5 + $0x358] sm:$0xff]
    %v168 = vld [vmem:[#allocation5 + $0x360] sm:$0xff]
    %v169 = vld [vmem:[#allocation5 + $0x368] sm:$0xff]
    %v170 = vld [vmem:[#allocation5 + $0x370] sm:$0xff]
    %v171 = vld [vmem:[#allocation5 + $0x378] sm:$0xff]
    %v172 = vld [vmem:[#allocation5 + $0x380] sm:$0xff]
    %v173 = vld [vmem:[#allocation5 + $0x388] sm:$0xff]
    %v174 = vld [vmem:[#allocation5 + $0x390] sm:$0xff]
    %v175 = vld [vmem:[#allocation5 + $0x398] sm:$0xff]
    %v176 = vld [vmem:[#allocation5 + $0x3a0] sm:$0xff]
    %v177 = vld [vmem:[#allocation5 + $0x3a8] sm:$0xff]
    %v178 = vld [vmem:[#allocation5 + $0x3b0] sm:$0xff]
    %v179 = vld [vmem:[#allocation5 + $0x3b8] sm:$0xff]
    %v180 = vld [vmem:[#allocation5 + $0x3c0] sm:$0xff]
    %v181 = vld [vmem:[#allocation5 + $0x3c8] sm:$0xff]
    %v182 = vld [vmem:[#allocation5 + $0x3d0] sm:$0xff]
    %v183 = vld [vmem:[#allocation5 + $0x3d8] sm:$0xff]
    %v184 = vld [vmem:[#allocation5 + $0x3e0] sm:$0xff]
    %v185 = vld [vmem:[#allocation5 + $0x3e8] sm:$0xff]
    %v186 = vld [vmem:[#allocation5 + $0x3f0] sm:$0xff]
    %v187 = vld [vmem:[#allocation5 + $0x3f8] sm:$0xff]
    %v188 = vld [vmem:[#allocation5 + $0x400] sm:$0xff]
    %v189 = vld [vmem:[#allocation5 + $0x408] sm:$0xff]
    %v190 = vld [vmem:[#allocation5 + $0x410] sm:$0xff]
    %v191 = vld [vmem:[#allocation5 + $0x418] sm:$0xff]
    %v192 = vld [vmem:[#allocation5 + $0x420] sm:$0xff]
    %v193 = vld [vmem:[#allocation5 + $0x428] sm:$0xff]
    %v194 = vld [vmem:[#allocation5 + $0x430] sm:$0xff]
    %v195 = vld [vmem:[#allocation5 + $0x438] sm:$0xff]
    %v196 = vld [vmem:[#allocation5 + $0x440] sm:$0xff]
    %v197 = vld [vmem:[#allocation5 + $0x448] sm:$0xff]
    %v198 = vld [vmem:[#allocation5 + $0x450] sm:$0xff]
    %v199 = vld [vmem:[#allocation5 + $0x458] sm:$0xff]
    %v200 = vld [vmem:[#allocation5 + $0x460] sm:$0xff]
    %v201 = vld [vmem:[#allocation5 + $0x468] sm:$0xff]
    %v202 = vld [vmem:[#allocation5 + $0x470] sm:$0xff]
    %v203 = vld [vmem:[#allocation5 + $0x478] sm:$0xff]
    %v204 = vld [vmem:[#allocation5 + $0x480] sm:$0xff]
    %v205 = vld [vmem:[#allocation5 + $0x488] sm:$0xff]
    %v206 = vld [vmem:[#allocation5 + $0x490] sm:$0xff]
    %v207 = vld [vmem:[#allocation5 + $0x498] sm:$0xff]
    %v208 = vld [vmem:[#allocation5 + $0x4a0] sm:$0xff]
    %v209 = vld [vmem:[#allocation5 + $0x4a8] sm:$0xff]
    %v210 = vld [vmem:[#allocation5 + $0x4b0] sm:$0xff]
    %v211 = vld [vmem:[#allocation5 + $0x4b8] sm:$0xff]
    %v212 = vld [vmem:[#allocation5 + $0x4c0] sm:$0xff]
    %v213 = vld [vmem:[#allocation5 + $0x4c8] sm:$0xff]
    %v214 = vld [vmem:[#allocation5 + $0x4d0] sm:$0xff]
    %v215 = vld [vmem:[#allocation5 + $0x4d8] sm:$0xff]
    %v216 = vld [vmem:[#allocation5 + $0x4e0] sm:$0xff]
    %v217 = vld [vmem:[#allocation5 + $0x4e8] sm:$0xff]
    %v218 = vld [vmem:[#allocation5 + $0x4f0] sm:$0xff]
    %v219 = vld [vmem:[#allocation5 + $0x4f8] sm:$0xff]
    %v220 = vld [vmem:[#allocation5 + $0x500] sm:$0xff]
    %v221 = vld [vmem:[#allocation5 + $0x508] sm:$0xff]
    %v222 = vld [vmem:[#allocation5 + $0x510] sm:$0xff]
    %v223 = vld [vmem:[#allocation5 + $0x518] sm:$0xff]
    %v224 = vld [vmem:[#allocation5 + $0x520] sm:$0xff]
    %v225 = vld [vmem:[#allocation5 + $0x528] sm:$0xff]
    %v226 = vld [vmem:[#allocation5 + $0x530] sm:$0xff]
    %v227 = vld [vmem:[#allocation5 + $0x538] sm:$0xff]
    %v228 = vld [vmem:[#allocation5 + $0x540] sm:$0xff]
    %v229 = vld [vmem:[#allocation5 + $0x548] sm:$0xff]
    %v230 = vld [vmem:[#allocation5 + $0x550] sm:$0xff]
    %v231 = vld [vmem:[#allocation5 + $0x558] sm:$0xff]
    %v232 = vld [vmem:[#allocation5 + $0x560] sm:$0xff]
    %v233 = vld [vmem:[#allocation5 + $0x568] sm:$0xff]
    %v234 = vld [vmem:[#allocation5 + $0x570] sm:$0xff]
    %v235 = vld [vmem:[#allocation5 + $0x578] sm:$0xff]
    %v236 = vld [vmem:[#allocation5 + $0x580] sm:$0xff]
    %v237 = vld [vmem:[#allocation5 + $0x588] sm:$0xff]
    %v238 = vld [vmem:[#allocation5 + $0x590] sm:$0xff]
    %v239 = vld [vmem:[#allocation5 + $0x598] sm:$0xff]
    %v240 = vld [vmem:[#allocation5 + $0x5a0] sm:$0xff]
    %v241 = vld [vmem:[#allocation5 + $0x5a8] sm:$0xff]
    %v242 = vld [vmem:[#allocation5 + $0x5b0] sm:$0xff]
    %v243 = vld [vmem:[#allocation5 + $0x5b8] sm:$0xff]
    %v244 = vld [vmem:[#allocation5 + $0x5c0] sm:$0xff]
    %v245 = vld [vmem:[#allocation5 + $0x5c8] sm:$0xff]
    %v246 = vld [vmem:[#allocation5 + $0x5d0] sm:$0xff]
    %v247 = vld [vmem:[#allocation5 + $0x5d8] sm:$0xff]
    %v248 = vld [vmem:[#allocation5 + $0x5e0] sm:$0xff]
    %v249 = vld [vmem:[#allocation5 + $0x5e8] sm:$0xff]
    %v250 = vld [vmem:[#allocation5 + $0x5f0] sm:$0xff]
    %v251 = vld [vmem:[#allocation5 + $0x5f8] sm:$0xff]
    %v252 = vld [vmem:[#allocation5 + $0x600] sm:$0xff]
    %v253 = vld [vmem:[#allocation5 + $0x608] sm:$0xff]
    %v254 = vld [vmem:[#allocation5 + $0x610] sm:$0xff]
    %v255 = vld [vmem:[#allocation5 + $0x618] sm:$0xff]
    %v256 = vld [vmem:[#allocation5 + $0x620] sm:$0xff]
    %v257 = vld [vmem:[#allocation5 + $0x628] sm:$0xff]
    %v258 = vld [vmem:[#allocation5 + $0x630] sm:$0xff]
    %v259 = vld [vmem:[#allocation5 + $0x638] sm:$0xff]
    %v260 = vld [vmem:[#allocation5 + $0x640] sm:$0xff]
    %v261 = vld [vmem:[#allocation5 + $0x648] sm:$0xff]
    %v262 = vld [vmem:[#allocation5 + $0x650] sm:$0xff]
    %v263 = vld [vmem:[#allocation5 + $0x658] sm:$0xff]
    %v264 = vld [vmem:[#allocation5 + $0x660] sm:$0xff]
    %v265 = vld [vmem:[#allocation5 + $0x668] sm:$0xff]
    %v266 = vld [vmem:[#allocation5 + $0x670] sm:$0xff]
    %v267 = vld [vmem:[#allocation5 + $0x678] sm:$0xff]
    %v268 = vld [vmem:[#allocation5 + $0x680] sm:$0xff]
    %v269 = vld [vmem:[#allocation5 + $0x688] sm:$0xff]
    %v270 = vld [vmem:[#allocation5 + $0x690] sm:$0xff]
    %v271 = vld [vmem:[#allocation5 + $0x698] sm:$0xff]
    %v272 = vld [vmem:[#allocation5 + $0x6a0] sm:$0xff]
    %v273 = vld [vmem:[#allocation5 + $0x6a8] sm:$0xff]
    %v274 = vld [vmem:[#allocation5 + $0x6b0] sm:$0xff]
    %v275 = vld [vmem:[#allocation5 + $0x6b8] sm:$0xff]
    %v276 = vld [vmem:[#allocation5 + $0x6c0] sm:$0xff]
    %v277 = vld [vmem:[#allocation5 + $0x6c8] sm:$0xff]
    %v278 = vld [vmem:[#allocation5 + $0x6d0] sm:$0xff]
    %v279 = vld [vmem:[#allocation5 + $0x6d8] sm:$0xff]
    %v280 = vld [vmem:[#allocation5 + $0x6e0] sm:$0xff]
    %v281 = vld [vmem:[#allocation5 + $0x6e8] sm:$0xff]
    %v282 = vld [vmem:[#allocation5 + $0x6f0] sm:$0xff]
    %v283 = vld [vmem:[#allocation5 + $0x6f8] sm:$0xff]
    %v284 = vld [vmem:[#allocation5 + $0x700] sm:$0xff]
    %v285 = vld [vmem:[#allocation5 + $0x708] sm:$0xff]
    %v286 = vld [vmem:[#allocation5 + $0x710] sm:$0xff]
    %v287 = vld [vmem:[#allocation5 + $0x718] sm:$0xff]
    %v288 = vld [vmem:[#allocation5 + $0x720] sm:$0xff]
    %v289 = vld [vmem:[#allocation5 + $0x728] sm:$0xff]
    %v290 = vld [vmem:[#allocation5 + $0x730] sm:$0xff]
    %v291 = vld [vmem:[#allocation5 + $0x738] sm:$0xff]
    %v292 = vld [vmem:[#allocation5 + $0x740] sm:$0xff]
    %v293 = vld [vmem:[#allocation5 + $0x748] sm:$0xff]
    %v294 = vld [vmem:[#allocation5 + $0x750] sm:$0xff]
    %v295 = vld [vmem:[#allocation5 + $0x758] sm:$0xff]
    %v296 = vld [vmem:[#allocation5 + $0x760] sm:$0xff]
    %v297 = vld [vmem:[#allocation5 + $0x768] sm:$0xff]
    %v298 = vld [vmem:[#allocation5 + $0x770] sm:$0xff]
    %v299 = vld [vmem:[#allocation5 + $0x778] sm:$0xff]
    %v300 = vld [vmem:[#allocation5 + $0x780] sm:$0xff]
    %v301 = vld [vmem:[#allocation5 + $0x788] sm:$0xff]
    %v302 = vld [vmem:[#allocation5 + $0x790] sm:$0xff]
    %v303 = vld [vmem:[#allocation5 + $0x798] sm:$0xff]
    %v304 = vld [vmem:[#allocation5 + $0x7a0] sm:$0xff]
    %v305 = vld [vmem:[#allocation5 + $0x7a8] sm:$0xff]
    %v306 = vld [vmem:[#allocation5 + $0x7b0] sm:$0xff]
    %v307 = vld [vmem:[#allocation5 + $0x7b8] sm:$0xff]
    %v308 = vld [vmem:[#allocation5 + $0x7c0] sm:$0xff]
    %v309 = vld [vmem:[#allocation5 + $0x7c8] sm:$0xff]
    %v310 = vld [vmem:[#allocation5 + $0x7d0] sm:$0xff]
    %v311 = vld [vmem:[#allocation5 + $0x7d8] sm:$0xff]
    %v312 = vld [vmem:[#allocation5 + $0x7e0] sm:$0xff]
    %v313 = vld [vmem:[#allocation5 + $0x7e8] sm:$0xff]
    %v314 = vld [vmem:[#allocation5 + $0x7f0] sm:$0xff]
    %v315 = vld [vmem:[#allocation5 + $0x7f8] sm:$0xff]
    %v316 = vld [vmem:[#allocation7] sm:$0x3]
    %v317 = vld [vmem:[#allocation7 + $0x2] sm:$0x3]
    %v318 = vld [vmem:[#allocation7 + $0x4] sm:$0x3]
    %v319 = vld [vmem:[#allocation7 + $0x6] sm:$0x3]
    %v324 = vlaneseq
    %v325 = vshrl.u32 %v324, 7
    %v326 = vsub.s32 0, %v325
    %v327 = vrot.slane %v316, %v326
    %v328 = vlaneseq
    %v329 = vshrl.u32 %v328, 7
    %v330 = vsub.s32 1, %v329
    %v331 = vrot.slane %v316, %v330
    %v332 = vlaneseq
    %v333 = vshrl.u32 %v332, 7
    %v334 = vsub.s32 0, %v333
    %v335 = vrot.slane %v317, %v334
    %v336 = vlaneseq
    %v337 = vshrl.u32 %v336, 7
    %v338 = vsub.s32 1, %v337
    %v339 = vrot.slane %v317, %v338
    %v340 = vlaneseq
    %v341 = vshrl.u32 %v340, 7
    %v342 = vsub.s32 0, %v341
    %v343 = vrot.slane %v318, %v342
    %v344 = vlaneseq
    %v345 = vshrl.u32 %v344, 7
    %v346 = vsub.s32 1, %v345
    %v347 = vrot.slane %v318, %v346
    %v348 = vlaneseq
    %v349 = vshrl.u32 %v348, 7
    %v350 = vsub.s32 0, %v349
    %v351 = vrot.slane %v319, %v350
    %v352 = vlaneseq
    %v353 = vshrl.u32 %v352, 7
    %v354 = vsub.s32 1, %v353
    %v355 = vrot.slane %v319, %v354
    %v366 = vunpack.c.l.s4 1983009808
    %v367 = vunpack.c.0.s8 %v366
    %v368 = vlaneseq
    %v369 = vshrl.u32 %v368, 7
    %v370 = vsub.s32 %v367, %v369
    %v371 = vrot.slane %v56, %v370
    %v372 = vcombine.high %v371, %v371
    %375 = vmatprep.subr.mxu0 %v61
    %376 = vmatpush1.xpose.msra.mxu0 %v60
    %377 = vmatprep.subr.mxu0 %v63
    %378 = vmatpush1.xpose.msra.mxu0 %v62
    %379 = vmatprep.subr.mxu0 %v65
    %380 = vmatpush1.xpose.msra.mxu0 %v64
    %381 = vmatprep.subr.mxu0 %v67
    %382 = vmatpush1.xpose.msra.mxu0 %v66
    %383 = vmatprep.subr.mxu0 %v69
    %384 = vmatpush1.xpose.msra.mxu0 %v68
    %385 = vmatprep.subr.mxu0 %v71
    %386 = vmatpush1.xpose.msra.mxu0 %v70
    %387 = vmatprep.subr.mxu0 %v73
    %388 = vmatpush1.xpose.msra.mxu0 %v72
    %389 = vmatprep.subr.mxu0 %v75
    %390 = vmatpush1.xpose.msra.mxu0 %v74
    %391 = vmatprep.subr.mxu0 %v77
    %392 = vmatpush1.xpose.msra.mxu0 %v76
    %393 = vmatprep.subr.mxu0 %v79
    %394 = vmatpush1.xpose.msra.mxu0 %v78
    %395 = vmatprep.subr.mxu0 %v81
    %396 = vmatpush1.xpose.msra.mxu0 %v80
    %397 = vmatprep.subr.mxu0 %v83
    %398 = vmatpush1.xpose.msra.mxu0 %v82
    %399 = vmatprep.subr.mxu0 %v85
    %400 = vmatpush1.xpose.msra.mxu0 %v84
    %401 = vmatprep.subr.mxu0 %v87
    %402 = vmatpush1.xpose.msra.mxu0 %v86
    %403 = vmatprep.subr.mxu0 %v89
    %404 = vmatpush1.xpose.msra.mxu0 %v88
    %405 = vmatprep.subr.mxu0 %v91
    %406 = vmatpush1.xpose.msra.mxu0 %v90
    %407 = vmatprep.subr.mxu0 %v93
    %408 = vmatpush1.xpose.msra.mxu0 %v92
    %409 = vmatprep.subr.mxu0 %v95
    %410 = vmatpush1.xpose.msra.mxu0 %v94
    %411 = vmatprep.subr.mxu0 %v97
    %412 = vmatpush1.xpose.msra.mxu0 %v96
    %413 = vmatprep.subr.mxu0 %v99
    %414 = vmatpush1.xpose.msra.mxu0 %v98
    %415 = vmatprep.subr.mxu0 %v101
    %416 = vmatpush1.xpose.msra.mxu0 %v100
    %417 = vmatprep.subr.mxu0 %v103
    %418 = vmatpush1.xpose.msra.mxu0 %v102
    %419 = vmatprep.subr.mxu0 %v105
    %420 = vmatpush1.xpose.msra.mxu0 %v104
    %421 = vmatprep.subr.mxu0 %v107
    %422 = vmatpush1.xpose.msra.mxu0 %v106
    %423 = vmatprep.subr.mxu0 %v109
    %424 = vmatpush1.xpose.msra.mxu0 %v108
    %425 = vmatprep.subr.mxu0 %v111
    %426 = vmatpush1.xpose.msra.mxu0 %v110
    %427 = vmatprep.subr.mxu0 %v113
    %428 = vmatpush1.xpose.msra.mxu0 %v112
    %429 = vmatprep.subr.mxu0 %v115
    %430 = vmatpush1.xpose.msra.mxu0 %v114
    %431 = vmatprep.subr.mxu0 %v117
    %432 = vmatpush1.xpose.msra.mxu0 %v116
    %433 = vmatprep.subr.mxu0 %v119
    %434 = vmatpush1.xpose.msra.mxu0 %v118
    %435 = vmatprep.subr.mxu0 %v121
    %436 = vmatpush1.xpose.msra.mxu0 %v120
    %437 = vmatprep.subr.mxu0 %v123
    %438 = vmatpush1.xpose.msra.mxu0 %v122
    %439 = vmatprep.mubr.f32.mxu0 %v372
    %440 = vmatmul.mubr.f32.gmra.mrb[0].mxu0 %v371
    %v441 = vpop.f32.mrb[0].mxu0
    %v442 = vadd.f32 %v327, %v441
    %v443 = vpop.f32.mrb[0].mxu0
    %v444 = vadd.f32 %v331, %v443
    %445 = vdwg.mxu0
    %v448 = vunpack.c.l.s4 1983009808
    %v449 = vunpack.c.0.s8 %v448
    %v450 = vlaneseq
    %v451 = vshrl.u32 %v450, 7
    %v452 = vsub.s32 %v449, %v451
    %v453 = vrot.slane %v57, %v452
    %v454 = vcombine.high %v453, %v453
    %457 = vmatprep.subr.mxu0 %v125
    %458 = vmatpush1.xpose.msra.mxu0 %v124
    %459 = vmatprep.subr.mxu0 %v127
    %460 = vmatpush1.xpose.msra.mxu0 %v126
    %461 = vmatprep.subr.mxu0 %v129
    %462 = vmatpush1.xpose.msra.mxu0 %v128
    %463 = vmatprep.subr.mxu0 %v131
    %464 = vmatpush1.xpose.msra.mxu0 %v130
    %465 = vmatprep.subr.mxu0 %v133
    %466 = vmatpush1.xpose.msra.mxu0 %v132
    %467 = vmatprep.subr.mxu0 %v135
    %468 = vmatpush1.xpose.msra.mxu0 %v134
    %469 = vmatprep.subr.mxu0 %v137
    %470 = vmatpush1.xpose.msra.mxu0 %v136
    %471 = vmatprep.subr.mxu0 %v139
    %472 = vmatpush1.xpose.msra.mxu0 %v138
    %473 = vmatprep.subr.mxu0 %v141
    %474 = vmatpush1.xpose.msra.mxu0 %v140
    %475 = vmatprep.subr.mxu0 %v143
    %476 = vmatpush1.xpose.msra.mxu0 %v142
    %477 = vmatprep.subr.mxu0 %v145
    %478 = vmatpush1.xpose.msra.mxu0 %v144
    %479 = vmatprep.subr.mxu0 %v147
    %480 = vmatpush1.xpose.msra.mxu0 %v146
    %481 = vmatprep.subr.mxu0 %v149
    %482 = vmatpush1.xpose.msra.mxu0 %v148
    %483 = vmatprep.subr.mxu0 %v151
    %484 = vmatpush1.xpose.msra.mxu0 %v150
    %485 = vmatprep.subr.mxu0 %v153
    %486 = vmatpush1.xpose.msra.mxu0 %v152
    %487 = vmatprep.subr.mxu0 %v155
    %488 = vmatpush1.xpose.msra.mxu0 %v154
    %489 = vmatprep.subr.mxu0 %v157
    %490 = vmatpush1.xpose.msra.mxu0 %v156
    %491 = vmatprep.subr.mxu0 %v159
    %492 = vmatpush1.xpose.msra.mxu0 %v158
    %493 = vmatprep.subr.mxu0 %v161
    %494 = vmatpush1.xpose.msra.mxu0 %v160
    %495 = vmatprep.subr.mxu0 %v163
    %496 = vmatpush1.xpose.msra.mxu0 %v162
    %497 = vmatprep.subr.mxu0 %v165
    %498 = vmatpush1.xpose.msra.mxu0 %v164
    %499 = vmatprep.subr.mxu0 %v167
    %500 = vmatpush1.xpose.msra.mxu0 %v166
    %501 = vmatprep.subr.mxu0 %v169
    %502 = vmatpush1.xpose.msra.mxu0 %v168
    %503 = vmatprep.subr.mxu0 %v171
    %504 = vmatpush1.xpose.msra.mxu0 %v170
    %505 = vmatprep.subr.mxu0 %v173
    %506 = vmatpush1.xpose.msra.mxu0 %v172
    %507 = vmatprep.subr.mxu0 %v175
    %508 = vmatpush1.xpose.msra.mxu0 %v174
    %509 = vmatprep.subr.mxu0 %v177
    %510 = vmatpush1.xpose.msra.mxu0 %v176
    %511 = vmatprep.subr.mxu0 %v179
    %512 = vmatpush1.xpose.msra.mxu0 %v178
    %513 = vmatprep.subr.mxu0 %v181
    %514 = vmatpush1.xpose.msra.mxu0 %v180
    %515 = vmatprep.subr.mxu0 %v183
    %516 = vmatpush1.xpose.msra.mxu0 %v182
    %517 = vmatprep.subr.mxu0 %v185
    %518 = vmatpush1.xpose.msra.mxu0 %v184
    %519 = vmatprep.subr.mxu0 %v187
    %520 = vmatpush1.xpose.msra.mxu0 %v186
    %521 = vmatprep.mubr.f32.mxu0 %v454
    %522 = vmatmul.mubr.f32.gmra.mrb[0].mxu0 %v453
    %v523 = vpop.f32.mrb[0].mxu0
    %v524 = vadd.f32 %v335, %v523
    %v525 = vpop.f32.mrb[0].mxu0
    %v526 = vadd.f32 %v339, %v525
    %527 = vdwg.mxu0
    %v530 = vunpack.c.l.s4 1983009808
    %v531 = vunpack.c.0.s8 %v530
    %v532 = vlaneseq
    %v533 = vshrl.u32 %v532, 7
    %v534 = vsub.s32 %v531, %v533
    %v535 = vrot.slane %v58, %v534
    %v536 = vcombine.high %v535, %v535
    %539 = vmatprep.subr.mxu0 %v189
    %540 = vmatpush1.xpose.msra.mxu0 %v188
    %541 = vmatprep.subr.mxu0 %v191
    %542 = vmatpush1.xpose.msra.mxu0 %v190
    %543 = vmatprep.subr.mxu0 %v193
    %544 = vmatpush1.xpose.msra.mxu0 %v192
    %545 = vmatprep.subr.mxu0 %v195
    %546 = vmatpush1.xpose.msra.mxu0 %v194
    %547 = vmatprep.subr.mxu0 %v197
    %548 = vmatpush1.xpose.msra.mxu0 %v196
    %549 = vmatprep.subr.mxu0 %v199
    %550 = vmatpush1.xpose.msra.mxu0 %v198
    %551 = vmatprep.subr.mxu0 %v201
    %552 = vmatpush1.xpose.msra.mxu0 %v200
    %553 = vmatprep.subr.mxu0 %v203
    %554 = vmatpush1.xpose.msra.mxu0 %v202
    %555 = vmatprep.subr.mxu0 %v205
    %556 = vmatpush1.xpose.msra.mxu0 %v204
    %557 = vmatprep.subr.mxu0 %v207
    %558 = vmatpush1.xpose.msra.mxu0 %v206
    %559 = vmatprep.subr.mxu0 %v209
    %560 = vmatpush1.xpose.msra.mxu0 %v208
    %561 = vmatprep.subr.mxu0 %v211
    %562 = vmatpush1.xpose.msra.mxu0 %v210
    %563 = vmatprep.subr.mxu0 %v213
    %564 = vmatpush1.xpose.msra.mxu0 %v212
    %565 = vmatprep.subr.mxu0 %v215
    %566 = vmatpush1.xpose.msra.mxu0 %v214
    %567 = vmatprep.subr.mxu0 %v217
    %568 = vmatpush1.xpose.msra.mxu0 %v216
    %569 = vmatprep.subr.mxu0 %v219
    %570 = vmatpush1.xpose.msra.mxu0 %v218
    %571 = vmatprep.subr.mxu0 %v221
    %572 = vmatpush1.xpose.msra.mxu0 %v220
    %573 = vmatprep.subr.mxu0 %v223
    %574 = vmatpush1.xpose.msra.mxu0 %v222
    %575 = vmatprep.subr.mxu0 %v225
    %576 = vmatpush1.xpose.msra.mxu0 %v224
    %577 = vmatprep.subr.mxu0 %v227
    %578 = vmatpush1.xpose.msra.mxu0 %v226
    %579 = vmatprep.subr.mxu0 %v229
    %580 = vmatpush1.xpose.msra.mxu0 %v228
    %581 = vmatprep.subr.mxu0 %v231
    %582 = vmatpush1.xpose.msra.mxu0 %v230
    %583 = vmatprep.subr.mxu0 %v233
    %584 = vmatpush1.xpose.msra.mxu0 %v232
    %585 = vmatprep.subr.mxu0 %v235
    %586 = vmatpush1.xpose.msra.mxu0 %v234
    %587 = vmatprep.subr.mxu0 %v237
    %588 = vmatpush1.xpose.msra.mxu0 %v236
    %589 = vmatprep.subr.mxu0 %v239
    %590 = vmatpush1.xpose.msra.mxu0 %v238
    %591 = vmatprep.subr.mxu0 %v241
    %592 = vmatpush1.xpose.msra.mxu0 %v240
    %593 = vmatprep.subr.mxu0 %v243
    %594 = vmatpush1.xpose.msra.mxu0 %v242
    %595 = vmatprep.subr.mxu0 %v245
    %596 = vmatpush1.xpose.msra.mxu0 %v244
    %597 = vmatprep.subr.mxu0 %v247
    %598 = vmatpush1.xpose.msra.mxu0 %v246
    %599 = vmatprep.subr.mxu0 %v249
    %600 = vmatpush1.xpose.msra.mxu0 %v248
    %601 = vmatprep.subr.mxu0 %v251
    %602 = vmatpush1.xpose.msra.mxu0 %v250
    %603 = vmatprep.mubr.f32.mxu0 %v536
    %604 = vmatmul.mubr.f32.gmra.mrb[0].mxu0 %v535
    %v605 = vpop.f32.mrb[0].mxu0
    %v606 = vadd.f32 %v343, %v605
    %v607 = vpop.f32.mrb[0].mxu0
    %v608 = vadd.f32 %v347, %v607
    %609 = vdwg.mxu0
    %v612 = vunpack.c.l.s4 1983009808
    %v613 = vunpack.c.0.s8 %v612
    %v614 = vlaneseq
    %v615 = vshrl.u32 %v614, 7
    %v616 = vsub.s32 %v613, %v615
    %v617 = vrot.slane %v59, %v616
    %v618 = vcombine.high %v617, %v617
    %621 = vmatprep.subr.mxu0 %v253
    %622 = vmatpush1.xpose.msra.mxu0 %v252
    %623 = vmatprep.subr.mxu0 %v255
    %624 = vmatpush1.xpose.msra.mxu0 %v254
    %625 = vmatprep.subr.mxu0 %v257
    %626 = vmatpush1.xpose.msra.mxu0 %v256
    %627 = vmatprep.subr.mxu0 %v259
    %628 = vmatpush1.xpose.msra.mxu0 %v258
    %629 = vmatprep.subr.mxu0 %v261
    %630 = vmatpush1.xpose.msra.mxu0 %v260
    %631 = vmatprep.subr.mxu0 %v263
    %632 = vmatpush1.xpose.msra.mxu0 %v262
    %633 = vmatprep.subr.mxu0 %v265
    %634 = vmatpush1.xpose.msra.mxu0 %v264
    %635 = vmatprep.subr.mxu0 %v267
    %636 = vmatpush1.xpose.msra.mxu0 %v266
    %637 = vmatprep.subr.mxu0 %v269
    %638 = vmatpush1.xpose.msra.mxu0 %v268
    %639 = vmatprep.subr.mxu0 %v271
    %640 = vmatpush1.xpose.msra.mxu0 %v270
    %641 = vmatprep.subr.mxu0 %v273
    %642 = vmatpush1.xpose.msra.mxu0 %v272
    %643 = vmatprep.subr.mxu0 %v275
    %644 = vmatpush1.xpose.msra.mxu0 %v274
    %645 = vmatprep.subr.mxu0 %v277
    %646 = vmatpush1.xpose.msra.mxu0 %v276
    %647 = vmatprep.subr.mxu0 %v279
    %648 = vmatpush1.xpose.msra.mxu0 %v278
    %649 = vmatprep.subr.mxu0 %v281
    %650 = vmatpush1.xpose.msra.mxu0 %v280
    %651 = vmatprep.subr.mxu0 %v283
    %652 = vmatpush1.xpose.msra.mxu0 %v282
    %653 = vmatprep.subr.mxu0 %v285
    %654 = vmatpush1.xpose.msra.mxu0 %v284
    %655 = vmatprep.subr.mxu0 %v287
    %656 = vmatpush1.xpose.msra.mxu0 %v286
    %657 = vmatprep.subr.mxu0 %v289
    %658 = vmatpush1.xpose.msra.mxu0 %v288
    %659 = vmatprep.subr.mxu0 %v291
    %660 = vmatpush1.xpose.msra.mxu0 %v290
    %661 = vmatprep.subr.mxu0 %v293
    %662 = vmatpush1.xpose.msra.mxu0 %v292
    %663 = vmatprep.subr.mxu0 %v295
    %664 = vmatpush1.xpose.msra.mxu0 %v294
    %665 = vmatprep.subr.mxu0 %v297
    %666 = vmatpush1.xpose.msra.mxu0 %v296
    %667 = vmatprep.subr.mxu0 %v299
    %668 = vmatpush1.xpose.msra.mxu0 %v298
    %669 = vmatprep.subr.mxu0 %v301
    %670 = vmatpush1.xpose.msra.mxu0 %v300
    %671 = vmatprep.subr.mxu0 %v303
    %672 = vmatpush1.xpose.msra.mxu0 %v302
    %673 = vmatprep.subr.mxu0 %v305
    %674 = vmatpush1.xpose.msra.mxu0 %v304
    %675 = vmatprep.subr.mxu0 %v307
    %676 = vmatpush1.xpose.msra.mxu0 %v306
    %677 = vmatprep.subr.mxu0 %v309
    %678 = vmatpush1.xpose.msra.mxu0 %v308
    %679 = vmatprep.subr.mxu0 %v311
    %680 = vmatpush1.xpose.msra.mxu0 %v310
    %681 = vmatprep.subr.mxu0 %v313
    %682 = vmatpush1.xpose.msra.mxu0 %v312
    %683 = vmatprep.subr.mxu0 %v315
    %684 = vmatpush1.xpose.msra.mxu0 %v314
    %685 = vmatprep.mubr.f32.mxu0 %v618
    %686 = vmatmul.mubr.f32.gmra.mrb[0].mxu0 %v617
    %v687 = vpop.f32.mrb[0].mxu0
    %v688 = vadd.f32 %v351, %v687
    %v689 = vpop.f32.mrb[0].mxu0
    %v690 = vadd.f32 %v355, %v689
    %691 = vdwg.mxu0
    %v700 = vcombine.low %v442, %v444
    %v702 = vunpack.c.l.s4 1983009808
    %v703 = vunpack.c.0.s8 %v702
    %v704 = vlaneseq
    %v705 = vshrl.u32 %v704, 7
    %v706 = vsub.s32 %v703, %v705
    %v707 = vrot.slane %v700, %v706
    %v708 = vcombine.low %v524, %v526
    %v710 = vunpack.c.l.s4 1983009808
    %v711 = vunpack.c.0.s8 %v710
    %v712 = vlaneseq
    %v713 = vshrl.u32 %v712, 7
    %v714 = vsub.s32 %v711, %v713
    %v715 = vrot.slane %v708, %v714
    %v716 = vcombine.low %v606, %v608
    %v718 = vunpack.c.l.s4 1983009808
    %v719 = vunpack.c.0.s8 %v718
    %v720 = vlaneseq
    %v721 = vshrl.u32 %v720, 7
    %v722 = vsub.s32 %v719, %v721
    %v723 = vrot.slane %v716, %v722
    %v724 = vcombine.low %v688, %v690
    %v726 = vunpack.c.l.s4 1983009808
    %v727 = vunpack.c.0.s8 %v726
    %v728 = vlaneseq
    %v729 = vshrl.u32 %v728, 7
    %v730 = vsub.s32 %v727, %v729
    %v731 = vrot.slane %v724, %v730
    %736 = vst [vmem:[#allocation8] sm:$0xf] %v707
    %737 = vst [vmem:[#allocation8 + $0x4] sm:$0xf] %v715
    %738 = vst [vmem:[#allocation8 + $0x8] sm:$0xf] %v723
    %739 = vst [vmem:[#allocation8 + $0xc] sm:$0xf] %v731
    // Predicated region
    $region26: #{tpu_custom_call.1} parent=1 // pred_check
      _
    $region27: #{tpu_custom_call.1} parent=1 // pred_check_branch
      %741 = sbr.rel (0) target = $region29
    $region28: #{tpu_custom_call.1} parent=1 // pred_region
      %s743 = ssub.s32 256, 256
      %744 = vsyncadd [#allocation4], %s743
      %s745 = sshll.u32 [#allocation8], 4
      %s746 = int_to_ptr.vmem [resolvable:$true] %s745
      %751 = dma.vmem_to_hbm [thread:$0]  %s746, 256, %s3, [#allocation4], 64, 64, 4
    $region29: #{tpu_custom_call.1} parent=1 // pred_fallthru
      _
    // Predicated region
    $region30: #{tpu_custom_call.1} parent=1 // pred_check
      _
    $region31: #{tpu_custom_call.1} parent=1 // pred_check_branch
      %753 = sbr.rel (0) target = $region33
    $region32: #{tpu_custom_call.1} parent=1 // pred_region
      %754 = dma.done [#allocation4], 256
    $region33: #{tpu_custom_call.1} parent=1 // pred_fallthru
      _
    %755 = vsyncpa [#allocation3], 1
    %756 = vsyncpa [#allocation6], 1
    %757 = vsyncpa [#allocation4], 1

</llo_original>
